<compile_context>
chip_gen: v5e
topology: v5e:2x2
jax: 0.10.0
libtpu: 0.0.40
codegen_flags: <defaults>
</compile_context>

<pallas_src>
import jax
import jax.numpy as jnp
from jax.experimental import pallas as pl
from jax.experimental.pallas import tpu as pltpu

# ----------------------------- configuration -------------------------------
CHANNEL_NAMES = ("EDA", "HR", "TEMP")     # C = 3 input channels (dict keys)
SEQ_LEN = 16                              # T: samples per channel segment
CH_HIDDEN = 32                            # H: per-channel embedding size
FEAT_HIDDEN = 64                          # F: feature-encoder hidden size
REP_DIM = 32                              # R: representation size
ITEM_NAMES = ("activity", "valence")      # item predictor heads
ITEM_CLASSES = (5, 3)                     # classes per head
BATCH = 256                               # demo batch (tiled by B_TILE)

LANE = 128                                # lane-dense feature width
B_TILE = 128                              # batch rows per grid step


def _gelu(x):
    # tanh-approximate GELU (EUP-friendly elementwise op)
    return jax.nn.gelu(x, approximate=True)


# ------------------------------- kernel ------------------------------------
def classifier_kernel(x_ref, wenc_ref, benc_ref, w1_ref, b1_ref,
                      wout_ref, bout_ref, out_ref):
    # x_ref   : (B_TILE, 128)  flattened channels, cols >= C*T are zero
    # wenc_ref: (128, 128)     block-diagonal per-channel encoder weights
    # benc_ref: (1, 128)
    # w1_ref  : (128, 128)     feature encoder layer 1 (zero-padded)
    # b1_ref  : (1, 128)
    # wout_ref: (128, 128)     fused [w2 | w2 @ Wheads] (zero-padded)
    # bout_ref: (1, 128)       fused [b2 | b2 @ Wheads + bheads]
    # out_ref : (B_TILE, 128)  cols [0:R) = representation, [R:R+Na+Nb) = logits
    x = x_ref[...]

    # Stage 1: ChannelEncoder (block-diagonal Linear + GELU) -- one matmul.
    h = _gelu(jnp.dot(x, wenc_ref[...], preferred_element_type=jnp.float32)
              + benc_ref[...])

    # Stage 2: feature encoder layer 1.
    f = _gelu(jnp.dot(h, w1_ref[...], preferred_element_type=jnp.float32)
              + b1_ref[...])

    # Stage 3: fused [representation | item heads] -- one matmul, one
    # lane-dense 128-wide store.
    out = (jnp.dot(f, wout_ref[...], preferred_element_type=jnp.float32)
           + bout_ref[...])
    out_ref[...] = out.astype(out_ref.dtype)


# --------------------------- parameter packing ------------------------------
def pack_params(params):
    """Pack raw per-layer params into lane-dense (128-wide) kernel operands."""
    wc, bc, w1, b1, w2, b2, wa, ba, wb, bb = params
    C, T, H = wc.shape
    CH = C * H
    F = w1.shape[1]
    R = w2.shape[1]
    Na, Nb = wa.shape[1], wb.shape[1]
    assert C * T <= LANE and CH <= LANE and F <= LANE and R + Na + Nb <= LANE

    # Block-diagonal channel-encoder weight: (C*T, C*H) embedded in (128,128).
    wenc = jnp.zeros((LANE, LANE), jnp.float32)
    for c in range(C):
        wenc = wenc.at[c * T:(c + 1) * T, c * H:(c + 1) * H].set(wc[c])
    benc = jnp.zeros((1, LANE), jnp.float32).at[:, :CH].set(bc.reshape(1, CH))

    w1p = jnp.zeros((LANE, LANE), jnp.float32).at[:CH, :F].set(w1)
    b1p = jnp.zeros((1, LANE), jnp.float32).at[:, :F].set(b1)

    # Fuse the purely-linear item heads with feature-encoder layer 2:
    #   rep    = f @ w2 + b2
    #   logits = rep @ Wh + bh = f @ (w2 @ Wh) + (b2 @ Wh + bh)
    wh = jnp.concatenate([wa, wb], axis=1)                 # (R, Na+Nb)
    bh = jnp.concatenate([ba, bb], axis=1)                 # (1, Na+Nb)
    wcomb = jnp.concatenate([w2, w2 @ wh], axis=1)         # (F, R+Na+Nb)
    bcomb = jnp.concatenate([b2, b2 @ wh + bh], axis=1)    # (1, R+Na+Nb)
    wout = jnp.zeros((LANE, LANE), jnp.float32).at[:F, :R + Na + Nb].set(wcomb)
    bout = jnp.zeros((1, LANE), jnp.float32).at[:, :R + Na + Nb].set(bcomb)
    return (wenc, benc, w1p, b1p, wout, bout)


# ------------------------------- wrapper ------------------------------------
@jax.jit
def classifier_forward(x_stacked, packed_params):
    """x_stacked: (C, B, T) channel-major stack of the input dict."""
    wenc, benc, w1p, b1p, wout, bout = packed_params
    C, B, T = x_stacked.shape
    Na, Nb = ITEM_CLASSES

    # Flatten channels -> (B, C*T), pad to a lane-dense (B_pad, 128) slab.
    x2 = jnp.transpose(x_stacked, (1, 0, 2)).reshape(B, C * T)
    b_pad = ((B + B_TILE - 1) // B_TILE) * B_TILE
    x_pad = jnp.zeros((b_pad, LANE), jnp.float32).at[:B, :C * T].set(x2)
    num_tiles = b_pad // B_TILE

    resident = lambda i: (0, 0)   # weights stay in VMEM across all batch tiles
    batch_map = lambda i: (i, 0)  # stream only the x / output tiles

    out_slab = pl.pallas_call(
        classifier_kernel,
        out_shape=jax.ShapeDtypeStruct((b_pad, LANE), jnp.float32),
        grid=(num_tiles,),
        in_specs=[
            pl.BlockSpec((B_TILE, LANE), batch_map),   # x
            pl.BlockSpec((LANE, LANE), resident),      # wenc
            pl.BlockSpec((1, LANE), resident),         # benc
            pl.BlockSpec((LANE, LANE), resident),      # w1
            pl.BlockSpec((1, LANE), resident),         # b1
            pl.BlockSpec((LANE, LANE), resident),      # wout
            pl.BlockSpec((1, LANE), resident),         # bout
        ],
        out_specs=pl.BlockSpec((B_TILE, LANE), batch_map),
        compiler_params=pltpu.CompilerParams(
            dimension_semantics=("parallel",)),        # shards across v7x's 2 TCs
    )(x_pad, wenc, benc, w1p, b1p, wout, bout)

    rep = out_slab[:B, :REP_DIM]
    out_a = out_slab[:B, REP_DIM:REP_DIM + Na]
    out_b = out_slab[:B, REP_DIM + Na:REP_DIM + Na + Nb]
    outputs = {ITEM_NAMES[0]: out_a, ITEM_NAMES[1]: out_b}
    return outputs, rep


# --------------------------- init & pure-JAX reference ----------------------
def init_params(key):
    C = len(CHANNEL_NAMES)
    Na, Nb = ITEM_CLASSES
    keys = jax.random.split(key, 10)

    def dense(k, fan_in, shape):
        return (jax.random.normal(k, shape, jnp.float32)
                * (1.0 / jnp.sqrt(fan_in)))

    wc = dense(keys[0], SEQ_LEN, (C, SEQ_LEN, CH_HIDDEN))
    bc = jnp.zeros((C, 1, CH_HIDDEN), jnp.float32)
    w1 = dense(keys[1], C * CH_HIDDEN, (C * CH_HIDDEN, FEAT_HIDDEN))
    b1 = jnp.zeros((1, FEAT_HIDDEN), jnp.float32)
    w2 = dense(keys[2], FEAT_HIDDEN, (FEAT_HIDDEN, REP_DIM))
    b2 = jnp.zeros((1, REP_DIM), jnp.float32)
    wa = dense(keys[3], REP_DIM, (REP_DIM, ITEM_CLASSES[0]))
    ba = jnp.zeros((1, ITEM_CLASSES[0]), jnp.float32)
    wb = dense(keys[4], REP_DIM, (REP_DIM, ITEM_CLASSES[1]))
    bb = jnp.zeros((1, ITEM_CLASSES[1]), jnp.float32)
    return (wc, bc, w1, b1, w2, b2, wa, ba, wb, bb)


def reference_forward(x_stacked, params):
    # pure-JAX reference mirroring the original module structure
    (wc, bc, w1, b1, w2, b2, wa, ba, wb, bb) = params
    feats = [_gelu(x_stacked[c] @ wc[c] + bc[c]) for c in range(x_stacked.shape[0])]
    z = jnp.concatenate(feats, axis=-1)
    f = _gelu(z @ w1 + b1)
    rep = f @ w2 + b2
    return {ITEM_NAMES[0]: rep @ wa + ba, ITEM_NAMES[1]: rep @ wb + bb}, rep


if __name__ == "__main__":
    key = jax.random.PRNGKey(0)
    k_param, k_data = jax.random.split(key)
    params = init_params(k_param)
    packed = pack_params(params)          # one-time weight packing (outside jit)

    # inputs is a dict of per-channel time series (B, T) like the torch module
    data_keys = jax.random.split(k_data, len(CHANNEL_NAMES))
    inputs = {
        name: jax.random.normal(k, (BATCH, SEQ_LEN), jnp.float32)
        for name, k in zip(CHANNEL_NAMES, data_keys)
    }
    x_stacked = jnp.stack([inputs[n] for n in CHANNEL_NAMES], axis=0)  # (C,B,T)

    outputs, representation = classifier_forward(x_stacked, packed)
    jax.block_until_ready((outputs, representation))

    # correctness check against pure-JAX reference
    ref_out, ref_rep = reference_forward(x_stacked, params)
    assert representation.shape == (BATCH, REP_DIM)
    assert jnp.allclose(representation, ref_rep, atol=1e-4, rtol=1e-4)
    for name, ncls in zip(ITEM_NAMES, ITEM_CLASSES):
        assert outputs[name].shape == (BATCH, ncls)
        assert jnp.allclose(outputs[name], ref_out[name], atol=1e-4, rtol=1e-4)

    print("KERNEL_OK")
</pallas_src>

<mosaic_0001>
module attributes {stable_mosaic.version = 11 : i64} {
  func.func @classifier_kernel(%arg0: i32, %arg1: memref<128x128xf32, #tpu.memory_space<vmem>>, %arg2: memref<128x128xf32, #tpu.memory_space<vmem>>, %arg3: memref<1x128xf32, #tpu.memory_space<vmem>>, %arg4: memref<128x128xf32, #tpu.memory_space<vmem>>, %arg5: memref<1x128xf32, #tpu.memory_space<vmem>>, %arg6: memref<128x128xf32, #tpu.memory_space<vmem>>, %arg7: memref<1x128xf32, #tpu.memory_space<vmem>>, %arg8: memref<128x128xf32, #tpu.memory_space<vmem>>) attributes {dimension_semantics = [#tpu.dimension_semantics<parallel>], iteration_bounds = array<i64: 2>, scalar_prefetch = 0 : i64, scratch_operands = 0 : i64, tpu.core_type = #tpu.core_type<tc>, window_params = [{transform_indices = @transform_0, window_bounds = array<i64: 128, 128>}, {pipeline_mode = #tpu.pipeline_mode<synchronous>, transform_indices = @transform_1, window_bounds = array<i64: 128, 128>}, {pipeline_mode = #tpu.pipeline_mode<synchronous>, transform_indices = @transform_2, window_bounds = array<i64: 1, 128>}, {pipeline_mode = #tpu.pipeline_mode<synchronous>, transform_indices = @transform_3, window_bounds = array<i64: 128, 128>}, {pipeline_mode = #tpu.pipeline_mode<synchronous>, transform_indices = @transform_4, window_bounds = array<i64: 1, 128>}, {pipeline_mode = #tpu.pipeline_mode<synchronous>, transform_indices = @transform_5, window_bounds = array<i64: 128, 128>}, {pipeline_mode = #tpu.pipeline_mode<synchronous>, transform_indices = @transform_6, window_bounds = array<i64: 1, 128>}, {transform_indices = @transform_7, window_bounds = array<i64: 128, 128>}]} {
    %c0 = arith.constant 0 : index
    %c0_0 = arith.constant 0 : index
    %0 = vector.load %arg1[%c0, %c0_0] : memref<128x128xf32, #tpu.memory_space<vmem>>, vector<128x128xf32>
    %c0_1 = arith.constant 0 : index
    %c0_2 = arith.constant 0 : index
    %1 = vector.load %arg2[%c0_1, %c0_2] : memref<128x128xf32, #tpu.memory_space<vmem>>, vector<128x128xf32>
    %cst = arith.constant dense<0.000000e+00> : vector<128x128xf32>
    %2 = tpu.matmul %0, %1, %cst {dimension_numbers = #tpu.dot_dimension_numbers<[1], [0], [0], [1], [0, 0, 1, 1], [], []>} : vector<128x128xf32>, vector<128x128xf32>, vector<128x128xf32> -> vector<128x128xf32>
    %c0_3 = arith.constant 0 : index
    %c0_4 = arith.constant 0 : index
    %3 = vector.load %arg3[%c0_3, %c0_4] : memref<1x128xf32, #tpu.memory_space<vmem>>, vector<1x128xf32>
    %4 = vector.broadcast %3 : vector<1x128xf32> to vector<128x128xf32>
    %5 = arith.addf %2, %4 : vector<128x128xf32>
    %6 = arith.mulf %5, %5 : vector<128x128xf32>
    %7 = arith.mulf %5, %6 : vector<128x128xf32>
    %cst_5 = arith.constant 4.471500e-02 : f32
    %8 = vector.broadcast %cst_5 : f32 to vector<128x128xf32>
    %9 = arith.mulf %8, %7 : vector<128x128xf32>
    %10 = arith.addf %5, %9 : vector<128x128xf32>
    %cst_6 = arith.constant 0.797884583 : f32
    %11 = vector.broadcast %cst_6 : f32 to vector<128x128xf32>
    %12 = arith.mulf %11, %10 : vector<128x128xf32>
    %13 = math.tanh %12 : vector<128x128xf32>
    %cst_7 = arith.constant 1.000000e+00 : f32
    %14 = vector.broadcast %cst_7 : f32 to vector<128x128xf32>
    %15 = arith.addf %14, %13 : vector<128x128xf32>
    %cst_8 = arith.constant 5.000000e-01 : f32
    %16 = vector.broadcast %cst_8 : f32 to vector<128x128xf32>
    %17 = arith.mulf %16, %15 : vector<128x128xf32>
    %18 = arith.mulf %5, %17 : vector<128x128xf32>
    %c0_9 = arith.constant 0 : index
    %c0_10 = arith.constant 0 : index
    %19 = vector.load %arg4[%c0_9, %c0_10] : memref<128x128xf32, #tpu.memory_space<vmem>>, vector<128x128xf32>
    %cst_11 = arith.constant dense<0.000000e+00> : vector<128x128xf32>
    %20 = tpu.matmul %18, %19, %cst_11 {dimension_numbers = #tpu.dot_dimension_numbers<[1], [0], [0], [1], [0, 0, 1, 1], [], []>} : vector<128x128xf32>, vector<128x128xf32>, vector<128x128xf32> -> vector<128x128xf32>
    %c0_12 = arith.constant 0 : index
    %c0_13 = arith.constant 0 : index
    %21 = vector.load %arg5[%c0_12, %c0_13] : memref<1x128xf32, #tpu.memory_space<vmem>>, vector<1x128xf32>
    %22 = vector.broadcast %21 : vector<1x128xf32> to vector<128x128xf32>
    %23 = arith.addf %20, %22 : vector<128x128xf32>
    %24 = arith.mulf %23, %23 : vector<128x128xf32>
    %25 = arith.mulf %23, %24 : vector<128x128xf32>
    %cst_14 = arith.constant 4.471500e-02 : f32
    %26 = vector.broadcast %cst_14 : f32 to vector<128x128xf32>
    %27 = arith.mulf %26, %25 : vector<128x128xf32>
    %28 = arith.addf %23, %27 : vector<128x128xf32>
    %cst_15 = arith.constant 0.797884583 : f32
    %29 = vector.broadcast %cst_15 : f32 to vector<128x128xf32>
    %30 = arith.mulf %29, %28 : vector<128x128xf32>
    %31 = math.tanh %30 : vector<128x128xf32>
    %cst_16 = arith.constant 1.000000e+00 : f32
    %32 = vector.broadcast %cst_16 : f32 to vector<128x128xf32>
    %33 = arith.addf %32, %31 : vector<128x128xf32>
    %cst_17 = arith.constant 5.000000e-01 : f32
    %34 = vector.broadcast %cst_17 : f32 to vector<128x128xf32>
    %35 = arith.mulf %34, %33 : vector<128x128xf32>
    %36 = arith.mulf %23, %35 : vector<128x128xf32>
    %c0_18 = arith.constant 0 : index
    %c0_19 = arith.constant 0 : index
    %37 = vector.load %arg6[%c0_18, %c0_19] : memref<128x128xf32, #tpu.memory_space<vmem>>, vector<128x128xf32>
    %cst_20 = arith.constant dense<0.000000e+00> : vector<128x128xf32>
    %38 = tpu.matmul %36, %37, %cst_20 {dimension_numbers = #tpu.dot_dimension_numbers<[1], [0], [0], [1], [0, 0, 1, 1], [], []>} : vector<128x128xf32>, vector<128x128xf32>, vector<128x128xf32> -> vector<128x128xf32>
    %c0_21 = arith.constant 0 : index
    %c0_22 = arith.constant 0 : index
    %39 = vector.load %arg7[%c0_21, %c0_22] : memref<1x128xf32, #tpu.memory_space<vmem>>, vector<1x128xf32>
    %40 = vector.broadcast %39 : vector<1x128xf32> to vector<128x128xf32>
    %41 = arith.addf %38, %40 : vector<128x128xf32>
    %c0_23 = arith.constant 0 : index
    %c0_24 = arith.constant 0 : index
    %42 = vector.load %arg8[%c0_23, %c0_24] : memref<128x128xf32, #tpu.memory_space<vmem>>, vector<128x128xf32>
    tpu.vector_store %arg8[%c0_23, %c0_24], %41 {strides = array<i32>} : memref<128x128xf32, #tpu.memory_space<vmem>>, vector<128x128xf32>,
    return
  }
  func.func @transform_0(%arg0: i32) -> (i32, i32) {
    %c0_i32 = arith.constant 0 : i32
    %c0_i32_0 = arith.constant 0 : i32
    return %arg0, %c0_i32 : i32, i32
  }
  func.func @transform_1(%arg0: i32) -> (i32, i32) {
    %c0_i32 = arith.constant 0 : i32
    %c0_i32_0 = arith.constant 0 : i32
    %c0_i32_1 = arith.constant 0 : i32
    return %c0_i32, %c0_i32_0 : i32, i32
  }
  func.func @transform_2(%arg0: i32) -> (i32, i32) {
    %c0_i32 = arith.constant 0 : i32
    %c0_i32_0 = arith.constant 0 : i32
    %c0_i32_1 = arith.constant 0 : i32
    return %c0_i32, %c0_i32_0 : i32, i32
  }
  func.func @transform_3(%arg0: i32) -> (i32, i32) {
    %c0_i32 = arith.constant 0 : i32
    %c0_i32_0 = arith.constant 0 : i32
    %c0_i32_1 = arith.constant 0 : i32
    return %c0_i32, %c0_i32_0 : i32, i32
  }
  func.func @transform_4(%arg0: i32) -> (i32, i32) {
    %c0_i32 = arith.constant 0 : i32
    %c0_i32_0 = arith.constant 0 : i32
    %c0_i32_1 = arith.constant 0 : i32
    return %c0_i32, %c0_i32_0 : i32, i32
  }
  func.func @transform_5(%arg0: i32) -> (i32, i32) {
    %c0_i32 = arith.constant 0 : i32
    %c0_i32_0 = arith.constant 0 : i32
    %c0_i32_1 = arith.constant 0 : i32
    return %c0_i32, %c0_i32_0 : i32, i32
  }
  func.func @transform_6(%arg0: i32) -> (i32, i32) {
    %c0_i32 = arith.constant 0 : i32
    %c0_i32_0 = arith.constant 0 : i32
    %c0_i32_1 = arith.constant 0 : i32
    return %c0_i32, %c0_i32_0 : i32, i32
  }
  func.func @transform_7(%arg0: i32) -> (i32, i32) {
    %c0_i32 = arith.constant 0 : i32
    %c0_i32_0 = arith.constant 0 : i32
    return %arg0, %c0_i32 : i32, i32
  }
}

</mosaic_0001>

<llo_original>
// kernel: classifier_forward.1
$region0: #{classifier_forward.1}
  #allocation0 [shape = 'u32[]', space=smem, size = 0x4, offset = 0x4, fixed_abs, tag = 'smem constant byte address 0x4 - core index']
  #allocation1 [shape = 'u32[72,128]{1,0:T(1,128)}', space=vmem, size = 0x9000, scoped, tag = 'internal scratch']
  %s0 = inlined_call_operand.vmem [shape: f32[256,128], index: 0, kind: input, shape index: {}]
  %s1 = inlined_call_operand.vmem [shape: f32[128,128], index: 1, kind: input, shape index: {}]
  %s2 = inlined_call_operand.vmem [shape: f32[1,128], index: 2, kind: input, shape index: {}]
  %s3 = inlined_call_operand.vmem [shape: f32[128,128], index: 3, kind: input, shape index: {}]
  %s4 = inlined_call_operand.vmem [shape: f32[1,128], index: 4, kind: input, shape index: {}]
  %s5 = inlined_call_operand.vmem [shape: f32[128,128], index: 5, kind: input, shape index: {}]
  %s6 = inlined_call_operand.vmem [shape: f32[1,128], index: 6, kind: input, shape index: {}]
  %s7 = inlined_call_operand.vmem [shape: f32[256,128], index: 7, kind: output, shape index: {}]
  %s8 = sld [smem:[#allocation0]]
  $region61: #{classifier_forward.1} parent=0
    _
  %s10 = ssub.s32 1, %s8
  %s11 = scalar_select 0, %s10, %s8
  loop: start=0, step=1, limit=4
  $region2: #{classifier_forward.1} parent=0 // loop_pre_header
    _
  $region3: #{classifier_forward.1} parent=0 // loop_header
    %s13 = sphi 0, %s17
    %p14 = scmp.ge.s32.totalorder %s13, 4
    %s23 = sphi 0, %s25
    %s26 = sphi 0, %s23
    %s27 = sphi 0, %s26
    %s43 = sphi 0, %s27
    %s47 = sphi 0, %s47
    %s49 = sphi 0, %s47
    %s50 = sphi 0, %s49
    %s64 = sphi 0, %s50
    %s68 = sphi 0, %s68
    %s70 = sphi 0, %s68
    %s71 = sphi 0, %s70
    %s85 = sphi 0, %s71
    %s89 = sphi 0, %s89
    %s91 = sphi 0, %s89
    %s92 = sphi 0, %s91
    %s106 = sphi 0, %s92
    %s110 = sphi 0, %s110
    %s112 = sphi 0, %s110
    %s113 = sphi 0, %s112
    %s127 = sphi 0, %s113
    %s131 = sphi 0, %s131
    %s133 = sphi 0, %s131
    %s134 = sphi 0, %s133
    %s148 = sphi 0, %s134
    %s152 = sphi 0, %s152
    %s154 = sphi 0, %s152
    %s155 = sphi 0, %s154
    %s169 = sphi 0, %s155
    %s175 = sphi 0, %s177
    %s178 = sphi 0, %s175
    %s179 = sphi 0, %s178
    %s195 = sphi 0, %s179
  $region4: #{classifier_forward.1} parent=0 // loop_header_branch
    %16 = sbr.rel (%p14) target = $region8
  $region5: #{classifier_forward.1} parent=0 // loop_body
    %s18 = ssub.s32 %s13, 1
    %s19 = ssub.s32 %s13, 2
    %s20 = sadd.s32 %s13, 1
    %s21 = ssub.s32 %s13, %s20
    %p22 = scmp.eq.s32.totalorder %s21, 0
    %s24 = sadd.s32 %s23, 1
    %s25 = scalar_select %p22, %s23, %s24
    %p28 = pneg %p22
    %p29 = scmp.eq.s32.totalorder %s13, 1
    %p30 = por %p28, %p29
    %p31 = scmp.ne.s32.totalorder %s23, %s26
    %p32 = scmp.eq.s32.totalorder %s13, 0
    %p33 = por %p31, %p32
    %p34 = scmp.ne.s32.totalorder %s23, %s26
    %p35 = scmp.eq.s32.totalorder %s18, 1
    %p36 = por %p34, %p35
    %p37 = scmp.ne.s32.totalorder %s26, %s27
    %p38 = scmp.eq.s32.totalorder %s18, 0
    %p39 = por %p37, %p38
    %p40 = scmp.ne.s32.totalorder %s26, %s27
    %p41 = scmp.eq.s32.totalorder %s19, 1
    %p42 = por %p40, %p41
    %p44 = scmp.ne.s32.totalorder %s27, %s43
    %p45 = scmp.eq.s32.totalorder %s19, 0
    %p46 = por %p44, %p45
    %s48 = sadd.s32 %s47, 1
    %p51 = scmp.eq.s32.totalorder %s13, 1
    %p52 = scmp.ne.s32.totalorder %s47, %s49
    %p53 = scmp.eq.s32.totalorder %s13, 0
    %p54 = por %p52, %p53
    %p55 = scmp.ne.s32.totalorder %s47, %s49
    %p56 = scmp.eq.s32.totalorder %s18, 1
    %p57 = por %p55, %p56
    %p58 = scmp.ne.s32.totalorder %s49, %s50
    %p59 = scmp.eq.s32.totalorder %s18, 0
    %p60 = por %p58, %p59
    %p61 = scmp.ne.s32.totalorder %s49, %s50
    %p62 = scmp.eq.s32.totalorder %s19, 1
    %p63 = por %p61, %p62
    %p65 = scmp.ne.s32.totalorder %s50, %s64
    %p66 = scmp.eq.s32.totalorder %s19, 0
    %p67 = por %p65, %p66
    %s69 = sadd.s32 %s68, 1
    %p72 = scmp.eq.s32.totalorder %s13, 1
    %p73 = scmp.ne.s32.totalorder %s68, %s70
    %p74 = scmp.eq.s32.totalorder %s13, 0
    %p75 = por %p73, %p74
    %p76 = scmp.ne.s32.totalorder %s68, %s70
    %p77 = scmp.eq.s32.totalorder %s18, 1
    %p78 = por %p76, %p77
    %p79 = scmp.ne.s32.totalorder %s70, %s71
    %p80 = scmp.eq.s32.totalorder %s18, 0
    %p81 = por %p79, %p80
    %p82 = scmp.ne.s32.totalorder %s70, %s71
    %p83 = scmp.eq.s32.totalorder %s19, 1
    %p84 = por %p82, %p83
    %p86 = scmp.ne.s32.totalorder %s71, %s85
    %p87 = scmp.eq.s32.totalorder %s19, 0
    %p88 = por %p86, %p87
    %s90 = sadd.s32 %s89, 1
    %p93 = scmp.eq.s32.totalorder %s13, 1
    %p94 = scmp.ne.s32.totalorder %s89, %s91
    %p95 = scmp.eq.s32.totalorder %s13, 0
    %p96 = por %p94, %p95
    %p97 = scmp.ne.s32.totalorder %s89, %s91
    %p98 = scmp.eq.s32.totalorder %s18, 1
    %p99 = por %p97, %p98
    %p100 = scmp.ne.s32.totalorder %s91, %s92
    %p101 = scmp.eq.s32.totalorder %s18, 0
    %p102 = por %p100, %p101
    %p103 = scmp.ne.s32.totalorder %s91, %s92
    %p104 = scmp.eq.s32.totalorder %s19, 1
    %p105 = por %p103, %p104
    %p107 = scmp.ne.s32.totalorder %s92, %s106
    %p108 = scmp.eq.s32.totalorder %s19, 0
    %p109 = por %p107, %p108
    %s111 = sadd.s32 %s110, 1
    %p114 = scmp.eq.s32.totalorder %s13, 1
    %p115 = scmp.ne.s32.totalorder %s110, %s112
    %p116 = scmp.eq.s32.totalorder %s13, 0
    %p117 = por %p115, %p116
    %p118 = scmp.ne.s32.totalorder %s110, %s112
    %p119 = scmp.eq.s32.totalorder %s18, 1
    %p120 = por %p118, %p119
    %p121 = scmp.ne.s32.totalorder %s112, %s113
    %p122 = scmp.eq.s32.totalorder %s18, 0
    %p123 = por %p121, %p122
    %p124 = scmp.ne.s32.totalorder %s112, %s113
    %p125 = scmp.eq.s32.totalorder %s19, 1
    %p126 = por %p124, %p125
    %p128 = scmp.ne.s32.totalorder %s113, %s127
    %p129 = scmp.eq.s32.totalorder %s19, 0
    %p130 = por %p128, %p129
    %s132 = sadd.s32 %s131, 1
    %p135 = scmp.eq.s32.totalorder %s13, 1
    %p136 = scmp.ne.s32.totalorder %s131, %s133
    %p137 = scmp.eq.s32.totalorder %s13, 0
    %p138 = por %p136, %p137
    %p139 = scmp.ne.s32.totalorder %s131, %s133
    %p140 = scmp.eq.s32.totalorder %s18, 1
    %p141 = por %p139, %p140
    %p142 = scmp.ne.s32.totalorder %s133, %s134
    %p143 = scmp.eq.s32.totalorder %s18, 0
    %p144 = por %p142, %p143
    %p145 = scmp.ne.s32.totalorder %s133, %s134
    %p146 = scmp.eq.s32.totalorder %s19, 1
    %p147 = por %p145, %p146
    %p149 = scmp.ne.s32.totalorder %s134, %s148
    %p150 = scmp.eq.s32.totalorder %s19, 0
    %p151 = por %p149, %p150
    %s153 = sadd.s32 %s152, 1
    %p156 = scmp.eq.s32.totalorder %s13, 1
    %p157 = scmp.ne.s32.totalorder %s152, %s154
    %p158 = scmp.eq.s32.totalorder %s13, 0
    %p159 = por %p157, %p158
    %p160 = scmp.ne.s32.totalorder %s152, %s154
    %p161 = scmp.eq.s32.totalorder %s18, 1
    %p162 = por %p160, %p161
    %p163 = scmp.ne.s32.totalorder %s154, %s155
    %p164 = scmp.eq.s32.totalorder %s18, 0
    %p165 = por %p163, %p164
    %p166 = scmp.ne.s32.totalorder %s154, %s155
    %p167 = scmp.eq.s32.totalorder %s19, 1
    %p168 = por %p166, %p167
    %p170 = scmp.ne.s32.totalorder %s155, %s169
    %p171 = scmp.eq.s32.totalorder %s19, 0
    %p172 = por %p170, %p171
    %s173 = ssub.s32 %s13, %s20
    %p174 = scmp.eq.s32.totalorder %s173, 0
    %s176 = sadd.s32 %s175, 1
    %s177 = scalar_select %p174, %s175, %s176
    %p180 = pneg %p174
    %p181 = scmp.eq.s32.totalorder %s13, 1
    %p182 = por %p180, %p181
    %p183 = scmp.ne.s32.totalorder %s175, %s178
    %p184 = scmp.eq.s32.totalorder %s13, 0
    %p185 = por %p183, %p184
    %p186 = scmp.ne.s32.totalorder %s175, %s178
    %p187 = scmp.eq.s32.totalorder %s18, 1
    %p188 = por %p186, %p187
    %p189 = scmp.ne.s32.totalorder %s178, %s179
    %p190 = scmp.eq.s32.totalorder %s18, 0
    %p191 = por %p189, %p190
    %p192 = scmp.ne.s32.totalorder %s178, %s179
    %p193 = scmp.eq.s32.totalorder %s19, 1
    %p194 = por %p192, %p193
    %p196 = scmp.ne.s32.totalorder %s179, %s195
    %p197 = scmp.eq.s32.totalorder %s19, 0
    %p198 = por %p196, %p197
    %p199 = scmp.le.s32.totalorder 1, %s13
    %p200 = scmp.lt.s32.totalorder %s13, 3
    %p201 = pnand %p199, %p200
    %p202 = pneg %p201
    // Predicated region
    $region9: #{classifier_forward.1} parent=5 // pred_check
      _
    $region10: #{classifier_forward.1} parent=5 // pred_check_branch
      %204 = sbr.rel (%p201) target = $region12
    $region11: #{classifier_forward.1} parent=5 // pred_region
      %s205 = ssub.s32 %s13, 1
      // Predicated region
      $region13: #{classifier_forward.1} parent=11 // pred_check
        %p206 = pneg %p60
      $region14: #{classifier_forward.1} parent=11 // pred_check_branch
        %208 = sbr.rel (%p206) target = $region16
      $region15: #{classifier_forward.1} parent=11 // pred_region
        _
      $region16: #{classifier_forward.1} parent=11 // pred_fallthru
        _
      // Predicated region
      $region17: #{classifier_forward.1} parent=11 // pred_check
        %p209 = pneg %p81
      $region18: #{classifier_forward.1} parent=11 // pred_check_branch
        %211 = sbr.rel (%p209) target = $region20
      $region19: #{classifier_forward.1} parent=11 // pred_region
        _
      $region20: #{classifier_forward.1} parent=11 // pred_fallthru
        _
      // Predicated region
      $region21: #{classifier_forward.1} parent=11 // pred_check
        %p212 = pneg %p102
      $region22: #{classifier_forward.1} parent=11 // pred_check_branch
        %214 = sbr.rel (%p212) target = $region24
      $region23: #{classifier_forward.1} parent=11 // pred_region
        _
      $region24: #{classifier_forward.1} parent=11 // pred_fallthru
        _
      // Predicated region
      $region25: #{classifier_forward.1} parent=11 // pred_check
        %p215 = pneg %p123
      $region26: #{classifier_forward.1} parent=11 // pred_check_branch
        %217 = sbr.rel (%p215) target = $region28
      $region27: #{classifier_forward.1} parent=11 // pred_region
        _
      $region28: #{classifier_forward.1} parent=11 // pred_fallthru
        _
      // Predicated region
      $region29: #{classifier_forward.1} parent=11 // pred_check
        %p218 = pneg %p144
      $region30: #{classifier_forward.1} parent=11 // pred_check_branch
        %220 = sbr.rel (%p218) target = $region32
      $region31: #{classifier_forward.1} parent=11 // pred_region
        _
      $region32: #{classifier_forward.1} parent=11 // pred_fallthru
        _
      // Predicated region
      $region33: #{classifier_forward.1} parent=11 // pred_check
        %p221 = pneg %p165
      $region34: #{classifier_forward.1} parent=11 // pred_check_branch
        %223 = sbr.rel (%p221) target = $region36
      $region35: #{classifier_forward.1} parent=11 // pred_region
        _
      $region36: #{classifier_forward.1} parent=11 // pred_fallthru
        _
    $region12: #{classifier_forward.1} parent=5 // pred_fallthru
      _
    %p224 = scmp.lt.s32.totalorder %s13, 2
    // Predicated region
    $region37: #{classifier_forward.1} parent=5 // pred_check
      %p225 = pneg %p224
    $region38: #{classifier_forward.1} parent=5 // pred_check_branch
      %227 = sbr.rel (%p225) target = $region40
    $region39: #{classifier_forward.1} parent=5 // pred_region
      // Predicated region
      $region41: #{classifier_forward.1} parent=39 // pred_check
        %p228 = pneg %p33
      $region42: #{classifier_forward.1} parent=39 // pred_check_branch
        %230 = sbr.rel (%p228) target = $region44
      $region43: #{classifier_forward.1} parent=39 // pred_region
        %s231 = smul.u32 16, %s13
        %p232 = scmp.lt.s32.totalorder %s231, 31
        %s233 = scalar_select %p232, %s231, 31
        %s234 = smul.addr %s233, 8
        %s235 = scalar_lea.vmem %s0, %s234
        %s236 = smul.u32 16, %s13
      $region44: #{classifier_forward.1} parent=39 // pred_fallthru
        _
    $region40: #{classifier_forward.1} parent=5 // pred_fallthru
      _
    %p237 = scmp.le.s32.totalorder 1, %s13
    %p238 = scmp.lt.s32.totalorder %s13, 3
    %p239 = pnand %p237, %p238
    %p240 = pneg %p239
    // Predicated region
    $region45: #{classifier_forward.1} parent=5 // pred_check
      _
    $region46: #{classifier_forward.1} parent=5 // pred_check_branch
      %242 = sbr.rel (%p239) target = $region48
    $region47: #{classifier_forward.1} parent=5 // pred_region
      %s243 = ssub.s32 %s13, 1
      %s244 = smul.u32 16, %s18
      %p245 = scmp.lt.s32.totalorder %s244, 31
      %s246 = scalar_select %p245, %s244, 31
      %s247 = smul.addr %s246, 8
      %s248 = scalar_lea.vmem %s0, %s247
      %p249 = pneg %p39
      %p250 = pneg %p36
      %p251 = pneg %p60
      %p252 = pneg %p57
      %p253 = pneg %p81
      %p254 = pneg %p78
      %p255 = pneg %p102
      %p256 = pneg %p99
      %p257 = pneg %p123
      %p258 = pneg %p120
      %p259 = pneg %p144
      %p260 = pneg %p141
      %p261 = pneg %p165
      %p262 = pneg %p162
      %p263 = pneg %p191
      %p264 = pneg %p188
      %s265 = smul.u32 16, %s18
      %p266 = scmp.lt.s32.totalorder %s265, 31
      %s267 = scalar_select %p266, %s265, 31
      %s268 = smul.addr %s267, 8
      %s269 = scalar_lea.vmem %s7, %s268
      %s270 = smul.u32 16, %s18
      %p271 = scmp.lt.s32.totalorder %s270, 31
      %s272 = scalar_select %p271, %s270, 31
      %s273 = smul.addr %s272, 8
      %s274 = scalar_lea.vmem %s0, %s273
      %s275 = smul.u32 16, %s18
      %s276 = smul.u32 16, %s18
      %p277 = scmp.lt.s32.totalorder %s276, 31
      %s278 = scalar_select %p277, %s276, 31
      %s279 = smul.addr %s278, 8
      %s280 = scalar_lea.vmem %s7, %s279
      %s281 = smul.u32 16, %s18
      %v282 = vld [vmem:[%s274] sm:$0xff]
      %v283 = vld [vmem:[%s274 + $0x8] sm:$0xff]
      %v284 = vld [vmem:[%s274 + $0x10] sm:$0xff]
      %v285 = vld [vmem:[%s274 + $0x18] sm:$0xff]
      %v286 = vld [vmem:[%s274 + $0x20] sm:$0xff]
      %v287 = vld [vmem:[%s274 + $0x28] sm:$0xff]
      %v288 = vld [vmem:[%s274 + $0x30] sm:$0xff]
      %v289 = vld [vmem:[%s274 + $0x38] sm:$0xff]
      %v290 = vld [vmem:[%s274 + $0x40] sm:$0xff]
      %v291 = vld [vmem:[%s274 + $0x48] sm:$0xff]
      %v292 = vld [vmem:[%s274 + $0x50] sm:$0xff]
      %v293 = vld [vmem:[%s274 + $0x58] sm:$0xff]
      %v294 = vld [vmem:[%s274 + $0x60] sm:$0xff]
      %v295 = vld [vmem:[%s274 + $0x68] sm:$0xff]
      %v296 = vld [vmem:[%s274 + $0x70] sm:$0xff]
      %v297 = vld [vmem:[%s274 + $0x78] sm:$0xff]
      %v298 = vld [vmem:[%s1] sm:$0xff]
      %v299 = vld [vmem:[%s1 + $0x8] sm:$0xff]
      %v300 = vld [vmem:[%s1 + $0x10] sm:$0xff]
      %v301 = vld [vmem:[%s1 + $0x18] sm:$0xff]
      %v302 = vld [vmem:[%s1 + $0x20] sm:$0xff]
      %v303 = vld [vmem:[%s1 + $0x28] sm:$0xff]
      %v304 = vld [vmem:[%s1 + $0x30] sm:$0xff]
      %v305 = vld [vmem:[%s1 + $0x38] sm:$0xff]
      %v306 = vld [vmem:[%s1 + $0x40] sm:$0xff]
      %v307 = vld [vmem:[%s1 + $0x48] sm:$0xff]
      %v308 = vld [vmem:[%s1 + $0x50] sm:$0xff]
      %v309 = vld [vmem:[%s1 + $0x58] sm:$0xff]
      %v310 = vld [vmem:[%s1 + $0x60] sm:$0xff]
      %v311 = vld [vmem:[%s1 + $0x68] sm:$0xff]
      %v312 = vld [vmem:[%s1 + $0x70] sm:$0xff]
      %v313 = vld [vmem:[%s1 + $0x78] sm:$0xff]
      %v314 = vld [vmem:[%s2] sm:$0x1]
      %v316 = vperm.slane %v314, 0
      %318 = vmatpush.msra.mxu0 %v313
      %319 = vmatpush.msra.mxu0 %v312
      %320 = vmatpush.msra.mxu0 %v311
      %321 = vmatpush.msra.mxu0 %v310
      %322 = vmatpush.msra.mxu0 %v309
      %323 = vmatpush.msra.mxu0 %v308
      %324 = vmatpush.msra.mxu0 %v307
      %325 = vmatpush.msra.mxu0 %v306
      %326 = vmatpush.msra.mxu0 %v305
      %327 = vmatpush.msra.mxu0 %v304
      %328 = vmatpush.msra.mxu0 %v303
      %329 = vmatpush.msra.mxu0 %v302
      %330 = vmatpush.msra.mxu0 %v301
      %331 = vmatpush.msra.mxu0 %v300
      %332 = vmatpush.msra.mxu0 %v299
      %333 = vmatpush.msra.mxu0 %v298
      %334 = vmatmul.f32.gmra.mxu0 %v282
      %v335 = vpop.f32.mrf.mxu0
      %v336 = vadd.f32 %v316, %v335
      %337 = vmatmul.f32.gmra.mxu0 %v283
      %v338 = vpop.f32.mrf.mxu0
      %v339 = vadd.f32 %v316, %v338
      %340 = vmatmul.f32.gmra.mxu0 %v284
      %v341 = vpop.f32.mrf.mxu0
      %v342 = vadd.f32 %v316, %v341
      %343 = vmatmul.f32.gmra.mxu0 %v285
      %v344 = vpop.f32.mrf.mxu0
      %v345 = vadd.f32 %v316, %v344
      %346 = vmatmul.f32.gmra.mxu0 %v286
      %v347 = vpop.f32.mrf.mxu0
      %v348 = vadd.f32 %v316, %v347
      %349 = vmatmul.f32.gmra.mxu0 %v287
      %v350 = vpop.f32.mrf.mxu0
      %v351 = vadd.f32 %v316, %v350
      %352 = vmatmul.f32.gmra.mxu0 %v288
      %v353 = vpop.f32.mrf.mxu0
      %v354 = vadd.f32 %v316, %v353
      %355 = vmatmul.f32.gmra.mxu0 %v289
      %v356 = vpop.f32.mrf.mxu0
      %v357 = vadd.f32 %v316, %v356
      %358 = vmatmul.f32.gmra.mxu0 %v290
      %v359 = vpop.f32.mrf.mxu0
      %v360 = vadd.f32 %v316, %v359
      %361 = vmatmul.f32.gmra.mxu0 %v291
      %v362 = vpop.f32.mrf.mxu0
      %v363 = vadd.f32 %v316, %v362
      %364 = vmatmul.f32.gmra.mxu0 %v292
      %v365 = vpop.f32.mrf.mxu0
      %v366 = vadd.f32 %v316, %v365
      %367 = vmatmul.f32.gmra.mxu0 %v293
      %v368 = vpop.f32.mrf.mxu0
      %v369 = vadd.f32 %v316, %v368
      %370 = vmatmul.f32.gmra.mxu0 %v294
      %v371 = vpop.f32.mrf.mxu0
      %v372 = vadd.f32 %v316, %v371
      %373 = vmatmul.f32.gmra.mxu0 %v295
      %v374 = vpop.f32.mrf.mxu0
      %v375 = vadd.f32 %v316, %v374
      %376 = vmatmul.f32.gmra.mxu0 %v296
      %v377 = vpop.f32.mrf.mxu0
      %v378 = vadd.f32 %v316, %v377
      %379 = vmatmul.f32.gmra.mxu0 %v297
      %v380 = vpop.f32.mrf.mxu0
      %v381 = vadd.f32 %v316, %v380
      %382 = vdwg.mxu0
      %v383 = vmul.f32 %v336, %v336
      %v384 = vmul.f32 %v339, %v339
      %v385 = vmul.f32 %v342, %v342
      %v386 = vmul.f32 %v345, %v345
      %v387 = vmul.f32 %v348, %v348
      %v388 = vmul.f32 %v351, %v351
      %v389 = vmul.f32 %v354, %v354
      %v390 = vmul.f32 %v357, %v357
      %v391 = vmul.f32 %v360, %v360
      %v392 = vmul.f32 %v363, %v363
      %v393 = vmul.f32 %v366, %v366
      %v394 = vmul.f32 %v369, %v369
      %v395 = vmul.f32 %v372, %v372
      %v396 = vmul.f32 %v375, %v375
      %v397 = vmul.f32 %v378, %v378
      %v398 = vmul.f32 %v381, %v381
      %v399 = vmul.f32 %v336, %v383
      %v400 = vmul.f32 %v339, %v384
      %v401 = vmul.f32 %v342, %v385
      %v402 = vmul.f32 %v345, %v386
      %v403 = vmul.f32 %v348, %v387
      %v404 = vmul.f32 %v351, %v388
      %v405 = vmul.f32 %v354, %v389
      %v406 = vmul.f32 %v357, %v390
      %v407 = vmul.f32 %v360, %v391
      %v408 = vmul.f32 %v363, %v392
      %v409 = vmul.f32 %v366, %v393
      %v410 = vmul.f32 %v369, %v394
      %v411 = vmul.f32 %v372, %v395
      %v412 = vmul.f32 %v375, %v396
      %v413 = vmul.f32 %v378, %v397
      %v414 = vmul.f32 %v381, %v398
      %v415 = vmul.f32 %v399, 0.044715
      %v416 = vmul.f32 %v400, 0.044715
      %v417 = vmul.f32 %v401, 0.044715
      %v418 = vmul.f32 %v402, 0.044715
      %v419 = vmul.f32 %v403, 0.044715
      %v420 = vmul.f32 %v404, 0.044715
      %v421 = vmul.f32 %v405, 0.044715
      %v422 = vmul.f32 %v406, 0.044715
      %v423 = vmul.f32 %v407, 0.044715
      %v424 = vmul.f32 %v408, 0.044715
      %v425 = vmul.f32 %v409, 0.044715
      %v426 = vmul.f32 %v410, 0.044715
      %v427 = vmul.f32 %v411, 0.044715
      %v428 = vmul.f32 %v412, 0.044715
      %v429 = vmul.f32 %v413, 0.044715
      %v430 = vmul.f32 %v414, 0.044715
      %v431 = vadd.f32 %v336, %v415
      %v432 = vadd.f32 %v339, %v416
      %v433 = vadd.f32 %v342, %v417
      %v434 = vadd.f32 %v345, %v418
      %v435 = vadd.f32 %v348, %v419
      %v436 = vadd.f32 %v351, %v420
      %v437 = vadd.f32 %v354, %v421
      %v438 = vadd.f32 %v357, %v422
      %v439 = vadd.f32 %v360, %v423
      %v440 = vadd.f32 %v363, %v424
      %v441 = vadd.f32 %v366, %v425
      %v442 = vadd.f32 %v369, %v426
      %v443 = vadd.f32 %v372, %v427
      %v444 = vadd.f32 %v375, %v428
      %v445 = vadd.f32 %v378, %v429
      %v446 = vadd.f32 %v381, %v430
      %v447 = vmul.f32 %v431, 0.7978846
      %v448 = vmul.f32 %v432, 0.7978846
      %v449 = vmul.f32 %v433, 0.7978846
      %v450 = vmul.f32 %v434, 0.7978846
      %v451 = vmul.f32 %v435, 0.7978846
      %v452 = vmul.f32 %v436, 0.7978846
      %v453 = vmul.f32 %v437, 0.7978846
      %v454 = vmul.f32 %v438, 0.7978846
      %v455 = vmul.f32 %v439, 0.7978846
      %v456 = vmul.f32 %v440, 0.7978846
      %v457 = vmul.f32 %v441, 0.7978846
      %v458 = vmul.f32 %v442, 0.7978846
      %v459 = vmul.f32 %v443, 0.7978846
      %v460 = vmul.f32 %v444, 0.7978846
      %v461 = vmul.f32 %v445, 0.7978846
      %v462 = vmul.f32 %v446, 0.7978846
      %v463 = vtanh.pop %v447
      %v464 = vtanh.pop %v448
      %v465 = vtanh.pop %v449
      %v466 = vtanh.pop %v450
      %v467 = vtanh.pop %v451
      %v468 = vtanh.pop %v452
      %v469 = vtanh.pop %v453
      %v470 = vtanh.pop %v454
      %v471 = vtanh.pop %v455
      %v472 = vtanh.pop %v456
      %v473 = vtanh.pop %v457
      %v474 = vtanh.pop %v458
      %v475 = vtanh.pop %v459
      %v476 = vtanh.pop %v460
      %v477 = vtanh.pop %v461
      %v478 = vtanh.pop %v462
      %v479 = vadd.f32 %v463, 1.0
      %v480 = vadd.f32 %v464, 1.0
      %v481 = vadd.f32 %v465, 1.0
      %v482 = vadd.f32 %v466, 1.0
      %v483 = vadd.f32 %v467, 1.0
      %v484 = vadd.f32 %v468, 1.0
      %v485 = vadd.f32 %v469, 1.0
      %v486 = vadd.f32 %v470, 1.0
      %v487 = vadd.f32 %v471, 1.0
      %v488 = vadd.f32 %v472, 1.0
      %v489 = vadd.f32 %v473, 1.0
      %v490 = vadd.f32 %v474, 1.0
      %v491 = vadd.f32 %v475, 1.0
      %v492 = vadd.f32 %v476, 1.0
      %v493 = vadd.f32 %v477, 1.0
      %v494 = vadd.f32 %v478, 1.0
      %v495 = vmul.f32 %v479, 0.5
      %v496 = vmul.f32 %v480, 0.5
      %v497 = vmul.f32 %v481, 0.5
      %v498 = vmul.f32 %v482, 0.5
      %v499 = vmul.f32 %v483, 0.5
      %v500 = vmul.f32 %v484, 0.5
      %v501 = vmul.f32 %v485, 0.5
      %v502 = vmul.f32 %v486, 0.5
      %v503 = vmul.f32 %v487, 0.5
      %v504 = vmul.f32 %v488, 0.5
      %v505 = vmul.f32 %v489, 0.5
      %v506 = vmul.f32 %v490, 0.5
      %v507 = vmul.f32 %v491, 0.5
      %v508 = vmul.f32 %v492, 0.5
      %v509 = vmul.f32 %v493, 0.5
      %v510 = vmul.f32 %v494, 0.5
      %v511 = vmul.f32 %v336, %v495
      %v512 = vmul.f32 %v339, %v496
      %v513 = vmul.f32 %v342, %v497
      %v514 = vmul.f32 %v345, %v498
      %v515 = vmul.f32 %v348, %v499
      %v516 = vmul.f32 %v351, %v500
      %v517 = vmul.f32 %v354, %v501
      %v518 = vmul.f32 %v357, %v502
      %v519 = vmul.f32 %v360, %v503
      %v520 = vmul.f32 %v363, %v504
      %v521 = vmul.f32 %v366, %v505
      %v522 = vmul.f32 %v369, %v506
      %v523 = vmul.f32 %v372, %v507
      %v524 = vmul.f32 %v375, %v508
      %v525 = vmul.f32 %v378, %v509
      %v526 = vmul.f32 %v381, %v510
      %v527 = vld [vmem:[%s3] sm:$0xff]
      %v528 = vld [vmem:[%s3 + $0x8] sm:$0xff]
      %v529 = vld [vmem:[%s3 + $0x10] sm:$0xff]
      %v530 = vld [vmem:[%s3 + $0x18] sm:$0xff]
      %v531 = vld [vmem:[%s3 + $0x20] sm:$0xff]
      %v532 = vld [vmem:[%s3 + $0x28] sm:$0xff]
      %v533 = vld [vmem:[%s3 + $0x30] sm:$0xff]
      %v534 = vld [vmem:[%s3 + $0x38] sm:$0xff]
      %v535 = vld [vmem:[%s3 + $0x40] sm:$0xff]
      %v536 = vld [vmem:[%s3 + $0x48] sm:$0xff]
      %v537 = vld [vmem:[%s3 + $0x50] sm:$0xff]
      %v538 = vld [vmem:[%s3 + $0x58] sm:$0xff]
      %v539 = vld [vmem:[%s3 + $0x60] sm:$0xff]
      %v540 = vld [vmem:[%s3 + $0x68] sm:$0xff]
      %v541 = vld [vmem:[%s3 + $0x70] sm:$0xff]
      %v542 = vld [vmem:[%s3 + $0x78] sm:$0xff]
      %v543 = vld [vmem:[%s4] sm:$0x1]
      %v545 = vperm.slane %v543, 0
      %547 = vmatpush.msra.mxu0 %v542
      %548 = vmatpush.msra.mxu0 %v541
      %549 = vmatpush.msra.mxu0 %v540
      %550 = vmatpush.msra.mxu0 %v539
      %551 = vmatpush.msra.mxu0 %v538
      %552 = vmatpush.msra.mxu0 %v537
      %553 = vmatpush.msra.mxu0 %v536
      %554 = vmatpush.msra.mxu0 %v535
      %555 = vmatpush.msra.mxu0 %v534
      %556 = vmatpush.msra.mxu0 %v533
      %557 = vmatpush.msra.mxu0 %v532
      %558 = vmatpush.msra.mxu0 %v531
      %559 = vmatpush.msra.mxu0 %v530
      %560 = vmatpush.msra.mxu0 %v529
      %561 = vmatpush.msra.mxu0 %v528
      %562 = vmatpush.msra.mxu0 %v527
      %563 = vmatmul.f32.gmra.mxu0 %v511
      %v564 = vpop.f32.mrf.mxu0
      %v565 = vadd.f32 %v545, %v564
      %566 = vmatmul.f32.gmra.mxu0 %v512
      %v567 = vpop.f32.mrf.mxu0
      %v568 = vadd.f32 %v545, %v567
      %569 = vmatmul.f32.gmra.mxu0 %v513
      %v570 = vpop.f32.mrf.mxu0
      %v571 = vadd.f32 %v545, %v570
      %572 = vmatmul.f32.gmra.mxu0 %v514
      %v573 = vpop.f32.mrf.mxu0
      %v574 = vadd.f32 %v545, %v573
      %575 = vmatmul.f32.gmra.mxu0 %v515
      %v576 = vpop.f32.mrf.mxu0
      %v577 = vadd.f32 %v545, %v576
      %578 = vmatmul.f32.gmra.mxu0 %v516
      %v579 = vpop.f32.mrf.mxu0
      %v580 = vadd.f32 %v545, %v579
      %581 = vmatmul.f32.gmra.mxu0 %v517
      %v582 = vpop.f32.mrf.mxu0
      %v583 = vadd.f32 %v545, %v582
      %584 = vmatmul.f32.gmra.mxu0 %v518
      %v585 = vpop.f32.mrf.mxu0
      %v586 = vadd.f32 %v545, %v585
      %587 = vmatmul.f32.gmra.mxu0 %v519
      %v588 = vpop.f32.mrf.mxu0
      %v589 = vadd.f32 %v545, %v588
      %590 = vmatmul.f32.gmra.mxu0 %v520
      %v591 = vpop.f32.mrf.mxu0
      %v592 = vadd.f32 %v545, %v591
      %593 = vmatmul.f32.gmra.mxu0 %v521
      %v594 = vpop.f32.mrf.mxu0
      %v595 = vadd.f32 %v545, %v594
      %596 = vmatmul.f32.gmra.mxu0 %v522
      %v597 = vpop.f32.mrf.mxu0
      %v598 = vadd.f32 %v545, %v597
      %599 = vmatmul.f32.gmra.mxu0 %v523
      %v600 = vpop.f32.mrf.mxu0
      %v601 = vadd.f32 %v545, %v600
      %602 = vmatmul.f32.gmra.mxu0 %v524
      %v603 = vpop.f32.mrf.mxu0
      %v604 = vadd.f32 %v545, %v603
      %605 = vmatmul.f32.gmra.mxu0 %v525
      %v606 = vpop.f32.mrf.mxu0
      %v607 = vadd.f32 %v545, %v606
      %608 = vmatmul.f32.gmra.mxu0 %v526
      %v609 = vpop.f32.mrf.mxu0
      %v610 = vadd.f32 %v545, %v609
      %611 = vdwg.mxu0
      %v612 = vmul.f32 %v565, %v565
      %v613 = vmul.f32 %v568, %v568
      %v614 = vmul.f32 %v571, %v571
      %v615 = vmul.f32 %v574, %v574
      %v616 = vmul.f32 %v577, %v577
      %v617 = vmul.f32 %v580, %v580
      %v618 = vmul.f32 %v583, %v583
      %v619 = vmul.f32 %v586, %v586
      %v620 = vmul.f32 %v589, %v589
      %v621 = vmul.f32 %v592, %v592
      %v622 = vmul.f32 %v595, %v595
      %v623 = vmul.f32 %v598, %v598
      %v624 = vmul.f32 %v601, %v601
      %v625 = vmul.f32 %v604, %v604
      %v626 = vmul.f32 %v607, %v607
      %v627 = vmul.f32 %v610, %v610
      %v628 = vmul.f32 %v565, %v612
      %v629 = vmul.f32 %v568, %v613
      %v630 = vmul.f32 %v571, %v614
      %v631 = vmul.f32 %v574, %v615
      %v632 = vmul.f32 %v577, %v616
      %v633 = vmul.f32 %v580, %v617
      %v634 = vmul.f32 %v583, %v618
      %v635 = vmul.f32 %v586, %v619
      %v636 = vmul.f32 %v589, %v620
      %v637 = vmul.f32 %v592, %v621
      %v638 = vmul.f32 %v595, %v622
      %v639 = vmul.f32 %v598, %v623
      %v640 = vmul.f32 %v601, %v624
      %v641 = vmul.f32 %v604, %v625
      %v642 = vmul.f32 %v607, %v626
      %v643 = vmul.f32 %v610, %v627
      %v644 = vmul.f32 %v628, 0.044715
      %v645 = vmul.f32 %v629, 0.044715
      %v646 = vmul.f32 %v630, 0.044715
      %v647 = vmul.f32 %v631, 0.044715
      %v648 = vmul.f32 %v632, 0.044715
      %v649 = vmul.f32 %v633, 0.044715
      %v650 = vmul.f32 %v634, 0.044715
      %v651 = vmul.f32 %v635, 0.044715
      %v652 = vmul.f32 %v636, 0.044715
      %v653 = vmul.f32 %v637, 0.044715
      %v654 = vmul.f32 %v638, 0.044715
      %v655 = vmul.f32 %v639, 0.044715
      %v656 = vmul.f32 %v640, 0.044715
      %v657 = vmul.f32 %v641, 0.044715
      %v658 = vmul.f32 %v642, 0.044715
      %v659 = vmul.f32 %v643, 0.044715
      %v660 = vadd.f32 %v565, %v644
      %v661 = vadd.f32 %v568, %v645
      %v662 = vadd.f32 %v571, %v646
      %v663 = vadd.f32 %v574, %v647
      %v664 = vadd.f32 %v577, %v648
      %v665 = vadd.f32 %v580, %v649
      %v666 = vadd.f32 %v583, %v650
      %v667 = vadd.f32 %v586, %v651
      %v668 = vadd.f32 %v589, %v652
      %v669 = vadd.f32 %v592, %v653
      %v670 = vadd.f32 %v595, %v654
      %v671 = vadd.f32 %v598, %v655
      %v672 = vadd.f32 %v601, %v656
      %v673 = vadd.f32 %v604, %v657
      %v674 = vadd.f32 %v607, %v658
      %v675 = vadd.f32 %v610, %v659
      %v676 = vmul.f32 %v660, 0.7978846
      %v677 = vmul.f32 %v661, 0.7978846
      %v678 = vmul.f32 %v662, 0.7978846
      %v679 = vmul.f32 %v663, 0.7978846
      %v680 = vmul.f32 %v664, 0.7978846
      %v681 = vmul.f32 %v665, 0.7978846
      %v682 = vmul.f32 %v666, 0.7978846
      %v683 = vmul.f32 %v667, 0.7978846
      %v684 = vmul.f32 %v668, 0.7978846
      %v685 = vmul.f32 %v669, 0.7978846
      %v686 = vmul.f32 %v670, 0.7978846
      %v687 = vmul.f32 %v671, 0.7978846
      %v688 = vmul.f32 %v672, 0.7978846
      %v689 = vmul.f32 %v673, 0.7978846
      %v690 = vmul.f32 %v674, 0.7978846
      %v691 = vmul.f32 %v675, 0.7978846
      %v692 = vtanh.pop %v676
      %v693 = vtanh.pop %v677
      %v694 = vtanh.pop %v678
      %v695 = vtanh.pop %v679
      %v696 = vtanh.pop %v680
      %v697 = vtanh.pop %v681
      %v698 = vtanh.pop %v682
      %v699 = vtanh.pop %v683
      %v700 = vtanh.pop %v684
      %v701 = vtanh.pop %v685
      %v702 = vtanh.pop %v686
      %v703 = vtanh.pop %v687
      %v704 = vtanh.pop %v688
      %v705 = vtanh.pop %v689
      %v706 = vtanh.pop %v690
      %v707 = vtanh.pop %v691
      %v708 = vadd.f32 %v692, 1.0
      %v709 = vadd.f32 %v693, 1.0
      %v710 = vadd.f32 %v694, 1.0
      %v711 = vadd.f32 %v695, 1.0
      %v712 = vadd.f32 %v696, 1.0
      %v713 = vadd.f32 %v697, 1.0
      %v714 = vadd.f32 %v698, 1.0
      %v715 = vadd.f32 %v699, 1.0
      %v716 = vadd.f32 %v700, 1.0
      %v717 = vadd.f32 %v701, 1.0
      %v718 = vadd.f32 %v702, 1.0
      %v719 = vadd.f32 %v703, 1.0
      %v720 = vadd.f32 %v704, 1.0
      %v721 = vadd.f32 %v705, 1.0
      %v722 = vadd.f32 %v706, 1.0
      %v723 = vadd.f32 %v707, 1.0
      %v724 = vmul.f32 %v708, 0.5
      %v725 = vmul.f32 %v709, 0.5
      %v726 = vmul.f32 %v710, 0.5
      %v727 = vmul.f32 %v711, 0.5
      %v728 = vmul.f32 %v712, 0.5
      %v729 = vmul.f32 %v713, 0.5
      %v730 = vmul.f32 %v714, 0.5
      %v731 = vmul.f32 %v715, 0.5
      %v732 = vmul.f32 %v716, 0.5
      %v733 = vmul.f32 %v717, 0.5
      %v734 = vmul.f32 %v718, 0.5
      %v735 = vmul.f32 %v719, 0.5
      %v736 = vmul.f32 %v720, 0.5
      %v737 = vmul.f32 %v721, 0.5
      %v738 = vmul.f32 %v722, 0.5
      %v739 = vmul.f32 %v723, 0.5
      %v740 = vmul.f32 %v565, %v724
      %v741 = vmul.f32 %v568, %v725
      %v742 = vmul.f32 %v571, %v726
      %v743 = vmul.f32 %v574, %v727
      %v744 = vmul.f32 %v577, %v728
      %v745 = vmul.f32 %v580, %v729
      %v746 = vmul.f32 %v583, %v730
      %v747 = vmul.f32 %v586, %v731
      %v748 = vmul.f32 %v589, %v732
      %v749 = vmul.f32 %v592, %v733
      %v750 = vmul.f32 %v595, %v734
      %v751 = vmul.f32 %v598, %v735
      %v752 = vmul.f32 %v601, %v736
      %v753 = vmul.f32 %v604, %v737
      %v754 = vmul.f32 %v607, %v738
      %v755 = vmul.f32 %v610, %v739
      %v756 = vld [vmem:[%s5] sm:$0xff]
      %v757 = vld [vmem:[%s5 + $0x8] sm:$0xff]
      %v758 = vld [vmem:[%s5 + $0x10] sm:$0xff]
      %v759 = vld [vmem:[%s5 + $0x18] sm:$0xff]
      %v760 = vld [vmem:[%s5 + $0x20] sm:$0xff]
      %v761 = vld [vmem:[%s5 + $0x28] sm:$0xff]
      %v762 = vld [vmem:[%s5 + $0x30] sm:$0xff]
      %v763 = vld [vmem:[%s5 + $0x38] sm:$0xff]
      %v764 = vld [vmem:[%s5 + $0x40] sm:$0xff]
      %v765 = vld [vmem:[%s5 + $0x48] sm:$0xff]
      %v766 = vld [vmem:[%s5 + $0x50] sm:$0xff]
      %v767 = vld [vmem:[%s5 + $0x58] sm:$0xff]
      %v768 = vld [vmem:[%s5 + $0x60] sm:$0xff]
      %v769 = vld [vmem:[%s5 + $0x68] sm:$0xff]
      %v770 = vld [vmem:[%s5 + $0x70] sm:$0xff]
      %v771 = vld [vmem:[%s5 + $0x78] sm:$0xff]
      %v772 = vld [vmem:[%s6] sm:$0x1]
      %v774 = vperm.slane %v772, 0
      %776 = vmatpush.msra.mxu0 %v771
      %777 = vmatpush.msra.mxu0 %v770
      %778 = vmatpush.msra.mxu0 %v769
      %779 = vmatpush.msra.mxu0 %v768
      %780 = vmatpush.msra.mxu0 %v767
      %781 = vmatpush.msra.mxu0 %v766
      %782 = vmatpush.msra.mxu0 %v765
      %783 = vmatpush.msra.mxu0 %v764
      %784 = vmatpush.msra.mxu0 %v763
      %785 = vmatpush.msra.mxu0 %v762
      %786 = vmatpush.msra.mxu0 %v761
      %787 = vmatpush.msra.mxu0 %v760
      %788 = vmatpush.msra.mxu0 %v759
      %789 = vmatpush.msra.mxu0 %v758
      %790 = vmatpush.msra.mxu0 %v757
      %791 = vmatpush.msra.mxu0 %v756
      %792 = vmatmul.f32.gmra.mxu0 %v740
      %v793 = vpop.f32.mrf.mxu0
      %v794 = vadd.f32 %v774, %v793
      %795 = vmatmul.f32.gmra.mxu0 %v741
      %v796 = vpop.f32.mrf.mxu0
      %v797 = vadd.f32 %v774, %v796
      %798 = vmatmul.f32.gmra.mxu0 %v742
      %v799 = vpop.f32.mrf.mxu0
      %v800 = vadd.f32 %v774, %v799
      %801 = vmatmul.f32.gmra.mxu0 %v743
      %v802 = vpop.f32.mrf.mxu0
      %v803 = vadd.f32 %v774, %v802
      %804 = vmatmul.f32.gmra.mxu0 %v744
      %v805 = vpop.f32.mrf.mxu0
      %v806 = vadd.f32 %v774, %v805
      %807 = vmatmul.f32.gmra.mxu0 %v745
      %v808 = vpop.f32.mrf.mxu0
      %v809 = vadd.f32 %v774, %v808
      %810 = vmatmul.f32.gmra.mxu0 %v746
      %v811 = vpop.f32.mrf.mxu0
      %v812 = vadd.f32 %v774, %v811
      %813 = vmatmul.f32.gmra.mxu0 %v747
      %v814 = vpop.f32.mrf.mxu0
      %v815 = vadd.f32 %v774, %v814
      %816 = vmatmul.f32.gmra.mxu0 %v748
      %v817 = vpop.f32.mrf.mxu0
      %v818 = vadd.f32 %v774, %v817
      %819 = vmatmul.f32.gmra.mxu0 %v749
      %v820 = vpop.f32.mrf.mxu0
      %v821 = vadd.f32 %v774, %v820
      %822 = vmatmul.f32.gmra.mxu0 %v750
      %v823 = vpop.f32.mrf.mxu0
      %v824 = vadd.f32 %v774, %v823
      %825 = vmatmul.f32.gmra.mxu0 %v751
      %v826 = vpop.f32.mrf.mxu0
      %v827 = vadd.f32 %v774, %v826
      %828 = vmatmul.f32.gmra.mxu0 %v752
      %v829 = vpop.f32.mrf.mxu0
      %v830 = vadd.f32 %v774, %v829
      %831 = vmatmul.f32.gmra.mxu0 %v753
      %v832 = vpop.f32.mrf.mxu0
      %v833 = vadd.f32 %v774, %v832
      %834 = vmatmul.f32.gmra.mxu0 %v754
      %v835 = vpop.f32.mrf.mxu0
      %v836 = vadd.f32 %v774, %v835
      %837 = vmatmul.f32.gmra.mxu0 %v755
      %v838 = vpop.f32.mrf.mxu0
      %v839 = vadd.f32 %v774, %v838
      %840 = vdwg.mxu0
      %841 = vst [vmem:[%s280] sm:$0xff] %v794
      %842 = vst [vmem:[%s280 + $0x8] sm:$0xff] %v797
      %843 = vst [vmem:[%s280 + $0x10] sm:$0xff] %v800
      %844 = vst [vmem:[%s280 + $0x18] sm:$0xff] %v803
      %845 = vst [vmem:[%s280 + $0x20] sm:$0xff] %v806
      %846 = vst [vmem:[%s280 + $0x28] sm:$0xff] %v809
      %847 = vst [vmem:[%s280 + $0x30] sm:$0xff] %v812
      %848 = vst [vmem:[%s280 + $0x38] sm:$0xff] %v815
      %849 = vst [vmem:[%s280 + $0x40] sm:$0xff] %v818
      %850 = vst [vmem:[%s280 + $0x48] sm:$0xff] %v821
      %851 = vst [vmem:[%s280 + $0x50] sm:$0xff] %v824
      %852 = vst [vmem:[%s280 + $0x58] sm:$0xff] %v827
      %853 = vst [vmem:[%s280 + $0x60] sm:$0xff] %v830
      %854 = vst [vmem:[%s280 + $0x68] sm:$0xff] %v833
      %855 = vst [vmem:[%s280 + $0x70] sm:$0xff] %v836
      %856 = vst [vmem:[%s280 + $0x78] sm:$0xff] %v839
      %s857 = smul.u32 16, %s18
      %p858 = scmp.lt.s32.totalorder %s857, 31
      %s859 = scalar_select %p858, %s857, 31
      %s860 = smul.addr %s859, 8
      %s861 = scalar_lea.vmem %s7, %s860
      // Predicated region
      $region49: #{classifier_forward.1} parent=47 // pred_check
        %p862 = pneg %p188
      $region50: #{classifier_forward.1} parent=47 // pred_check_branch
        %864 = sbr.rel (%p862) target = $region52
      $region51: #{classifier_forward.1} parent=47 // pred_region
        %s865 = smul.u32 16, %s18
      $region52: #{classifier_forward.1} parent=47 // pred_fallthru
        _
    $region48: #{classifier_forward.1} parent=5 // pred_fallthru
      _
    %p866 = scmp.le.s32.totalorder 2, %s13
    // Predicated region
    $region53: #{classifier_forward.1} parent=5 // pred_check
      %p867 = pneg %p866
    $region54: #{classifier_forward.1} parent=5 // pred_check_branch
      %869 = sbr.rel (%p867) target = $region56
    $region55: #{classifier_forward.1} parent=5 // pred_region
      %s870 = ssub.s32 %s13, 2
      // Predicated region
      $region57: #{classifier_forward.1} parent=55 // pred_check
        %p871 = pneg %p194
      $region58: #{classifier_forward.1} parent=55 // pred_check_branch
        %873 = sbr.rel (%p871) target = $region60
      $region59: #{classifier_forward.1} parent=55 // pred_region
        %s874 = smul.u32 16, %s19
        %p875 = scmp.lt.s32.totalorder %s874, 31
        %s876 = scalar_select %p875, %s874, 31
        %s877 = smul.addr %s876, 8
        %s878 = scalar_lea.vmem %s7, %s877
      $region60: #{classifier_forward.1} parent=55 // pred_fallthru
        _
    $region56: #{classifier_forward.1} parent=5 // pred_fallthru
      _
  $region6: #{classifier_forward.1} parent=0 // loop_footer
    %s17 = sadd.s32 1, %s13
  $region7: #{classifier_forward.1} parent=0 // loop_footer_branch
    %12 = sbr.rel target = $region3
  $region8: #{classifier_forward.1} parent=0 // loop_exit
    _

</llo_original>
